<compile_context>
chip_gen: v7x
topology: tpu7x:2x2x1
jax: 0.10.0
libtpu: 0.0.40
codegen_flags: <defaults>
</compile_context>

<pallas_src>
import math

import jax
import jax.numpy as jnp
from jax.experimental import pallas as pl
from jax.experimental.pallas import tpu as pltpu

D_MODEL = 64
NHEAD = 8
HEAD_DIM = D_MODEL // NHEAD
LN_EPS = 1e-5


def _cross_modal_kernel(x1_ref, x2_ref, wsv_ref, bsv_ref, svc_ref, wo_ref,
                        vec_ref, out_ref):
    """One grid step = BB batch elements.

    x1_ref: (S1, BB, E)   modality-1 rows, sequence-major (dense sublane tiles)
    x2_ref: (S2, BB, E)   modality-2 rows
    wsv_ref: (E, 2E)      fused [score | value] projection (CLS query folded in)
    bsv_ref: (1, 2E)      fused bias
    svc_ref: (1, 2E)      CLS row's [score | value] (batch-independent constants)
    wo_ref : (E, E)       output projection
    vec_ref: (3, E)       rows: [cls_token + out_proj_bias, ln_gamma, ln_beta]
    out_ref: (BB, E)      normalized CLS output
    """
    E = out_ref.shape[-1]
    wsv = wsv_ref[...]
    bsv = bsv_ref[...]

    def project(ref):
        # one lane-dense (BB, 64) @ (64, 128) MXU matmul per sequence position
        return [jnp.dot(ref[s], wsv, preferred_element_type=jnp.float32) + bsv
                for s in range(ref.shape[0])]

    # NOTE: sequence lengths here are the short modality-token sets of this
    # module; for long sequences this static unroll should become a grid axis.
    sv_rows = project(x1_ref) + project(x2_ref)         # list of (BB, 2E)
    s_rows = [r[:, :E] for r in sv_rows]                 # per-head logits
    v_rows = [r[:, E:] for r in sv_rows]                 # values
    svc = svc_ref[...]
    s_cls = svc[:, :E]                                    # (1, E) constants
    v_cls = svc[:, E:]

    # softmax over {CLS} U x1-rows U x2-rows, independently per batch / lane
    m = s_cls
    for s in s_rows:
        m = jnp.maximum(m, s)                             # (BB, E)
    p_cls = jnp.exp(s_cls - m)                            # (BB, E)
    denom = p_cls
    num = p_cls * v_cls
    for s, v in zip(s_rows, v_rows):
        p = jnp.exp(s - m)
        denom = denom + p
        num = num + p * v
    o = num * pl.reciprocal(denom, approx=False)          # CLS attention output

    # output projection + residual (CLS row + out-proj bias folded into vec[0])
    attn0 = jnp.dot(o, wo_ref[...], preferred_element_type=jnp.float32)
    resid = attn0 + vec_ref[0:1, :]                       # (BB, E)

    # LayerNorm over the feature axis
    mu = jnp.mean(resid, axis=-1, keepdims=True)
    var = jnp.mean(jnp.square(resid - mu), axis=-1, keepdims=True)
    normed = (resid - mu) * jax.lax.rsqrt(var + LN_EPS)
    out_ref[...] = (normed * vec_ref[1:2, :] + vec_ref[2:3, :]).astype(out_ref.dtype)


def _plan_batch_blocks(batch, seq_tokens):
    """Pick BB (multiple of 8) and the padded batch size.

    BB is VMEM-budgeted (<= 4096 activation rows / <= 1024 batches per step,
    comfortably inside the 32 MiB scoped VMEM used on v5e/v6e/v7x) and, when
    possible, small enough to leave >= 2 grid steps so the "parallel" grid
    axis can shard across both v7x TensorCores.
    """
    row_budget = 4096
    bb_budget = min(1024, max(8, (row_budget // max(seq_tokens, 1)) // 8 * 8))
    bb_split = max(8, ((-(-batch // 2)) + 7) // 8 * 8)   # ~half the batch, mult of 8
    bb = min(bb_budget, bb_split)
    b_pad = (-(-batch // bb)) * bb
    return bb, b_pad


def cross_modal_atten(x1, x2, params):
    """JAX wrapper reproducing Cross_modal_atten.forward (First=True, eval)."""
    E, Dh = D_MODEL, HEAD_DIM
    B = x1.shape[0]
    x1 = x1.reshape(B, -1, E).astype(jnp.float32)
    x2 = x2.reshape(B, -1, E).astype(jnp.float32)
    S1, S2 = x1.shape[1], x2.shape[1]

    # ---- parameter-only preprocessing (f32, done once outside the kernel) ----
    cls_tok = params["cls_token"].reshape(1, E).astype(jnp.float32)
    in_w = params["in_proj_weight"].astype(jnp.float32)         # (3E, E)
    in_b = params["in_proj_bias"].astype(jnp.float32)           # (3E,)
    wq, wk, wv = in_w[:E], in_w[E:2 * E], in_w[2 * E:]
    bq, bk, bv = in_b[:E], in_b[E:2 * E], in_b[2 * E:]

    # Fold the (scaled) CLS query into the key projection so that
    #   src @ w_score + b_score == per-head attention logits, replicated
    # across each head's HEAD_DIM lanes (lane-dense (E,E) weight).
    q0 = (cls_tok @ wq.T + bq) / math.sqrt(Dh)                  # (1, E)
    head = jnp.arange(E) // Dh
    same_head = (head[:, None] == head[None, :]).astype(jnp.float32)
    fold = q0.reshape(E, 1) * same_head                         # (E, E)
    w_score = wk.T @ fold
    b_score = bk.reshape(1, E) @ fold
    w_v = wv.T
    b_v = bv.reshape(1, E)

    w_sv = jnp.concatenate([w_score, w_v], axis=1)              # (E, 2E) fused
    b_sv = jnp.concatenate([b_score, b_v], axis=1)              # (1, 2E)
    sv_cls = cls_tok @ w_sv + b_sv                              # (1, 2E) CLS row

    w_o = params["out_proj_weight"].astype(jnp.float32).T       # (E, E)
    b_res = cls_tok + params["out_proj_bias"].astype(jnp.float32).reshape(1, E)
    gamma = params["ln_weight"].astype(jnp.float32).reshape(1, E)
    beta = params["ln_bias"].astype(jnp.float32).reshape(1, E)
    vec = jnp.concatenate([b_res, gamma, beta], axis=0)         # (3, E)

    # ---- batch blocking plan + sequence-major, batch-padded activations ----
    BB, B_pad = _plan_batch_blocks(B, S1 + S2)

    def seq_major(x):
        xt = jnp.swapaxes(x, 0, 1)                              # (S, B, E)
        if B_pad != B:
            xt = jnp.pad(xt, ((0, 0), (0, B_pad - B), (0, 0)))
        return xt

    x1_t = seq_major(x1)                                        # (S1, B_pad, E)
    x2_t = seq_major(x2)                                        # (S2, B_pad, E)

    grid = (B_pad // BB,)
    const = lambda i: (0, 0)

    out = pl.pallas_call(
        _cross_modal_kernel,
        out_shape=jax.ShapeDtypeStruct((B_pad, E), jnp.float32),
        grid=grid,
        in_specs=[
            pl.BlockSpec((S1, BB, E), lambda i: (0, i, 0)),     # x1 rows
            pl.BlockSpec((S2, BB, E), lambda i: (0, i, 0)),     # x2 rows
            pl.BlockSpec((E, 2 * E), const),                    # fused weight
            pl.BlockSpec((1, 2 * E), const),                    # fused bias
            pl.BlockSpec((1, 2 * E), const),                    # CLS score|value
            pl.BlockSpec((E, E), const),                        # output proj
            pl.BlockSpec((3, E), const),                        # b_res/gamma/beta
        ],
        out_specs=pl.BlockSpec((BB, E), lambda i: (i, 0)),
        compiler_params=pltpu.CompilerParams(
            dimension_semantics=("parallel",),
            vmem_limit_bytes=32 * 1024 * 1024),
    )(x1_t, x2_t, w_sv, b_sv, sv_cls, w_o, vec)

    return out[:B].reshape(B, 1, E)


def reference(x1, x2, params):
    """Pure-JAX reference of the same forward pass for verification."""
    E, H, Dh = D_MODEL, NHEAD, HEAD_DIM
    x = jnp.concatenate([x1, x2], axis=1)
    b = x.shape[0]
    cls = jnp.broadcast_to(params["cls_token"], (b, 1, E))
    src = jnp.concatenate([cls, x.reshape(b, -1, E)], axis=1)
    B, S, _ = src.shape

    in_w, in_b = params["in_proj_weight"], params["in_proj_bias"]
    q = src @ in_w[:E].T + in_b[:E]
    k = src @ in_w[E:2 * E].T + in_b[E:2 * E]
    v = src @ in_w[2 * E:].T + in_b[2 * E:]
    qh = q.reshape(B, S, H, Dh).transpose(0, 2, 1, 3)
    kh = k.reshape(B, S, H, Dh).transpose(0, 2, 1, 3)
    vh = v.reshape(B, S, H, Dh).transpose(0, 2, 1, 3)
    s = jnp.einsum('bhqd,bhkd->bhqk', qh, kh) / math.sqrt(Dh)
    p = jax.nn.softmax(s, axis=-1)
    o = jnp.einsum('bhqk,bhkd->bhqd', p, vh).transpose(0, 2, 1, 3).reshape(B, S, E)
    attn = o @ params["out_proj_weight"].T + params["out_proj_bias"]
    out = src + attn
    mu = out.mean(-1, keepdims=True)
    var = ((out - mu) ** 2).mean(-1, keepdims=True)
    normed = (out - mu) / jnp.sqrt(var + LN_EPS)
    normed = normed * params["ln_weight"] + params["ln_bias"]
    return normed[:, 0:1, :]


def init_params(key):
    E = D_MODEL
    ks = jax.random.split(key, 6)
    return {
        "cls_token": jax.random.normal(ks[0], (1, 1, E), jnp.float32),
        "in_proj_weight": 0.1 * jax.random.normal(ks[1], (3 * E, E), jnp.float32),
        "in_proj_bias": 0.1 * jax.random.normal(ks[2], (3 * E,), jnp.float32),
        "out_proj_weight": 0.1 * jax.random.normal(ks[3], (E, E), jnp.float32),
        "out_proj_bias": 0.1 * jax.random.normal(ks[4], (E,), jnp.float32),
        "ln_weight": jnp.ones((E,), jnp.float32) + 0.05 * jax.random.normal(ks[5], (E,), jnp.float32),
        "ln_bias": jnp.zeros((E,), jnp.float32),
    }


if __name__ == "__main__":
    key = jax.random.PRNGKey(0)
    kp, k1, k2 = jax.random.split(key, 3)
    params = init_params(kp)

    # small shapes: batch=2, two modality token sequences, d_model=64
    x1 = jax.random.normal(k1, (2, 1, D_MODEL), jnp.float32)
    x2 = jax.random.normal(k2, (2, 2, D_MODEL), jnp.float32)

    fwd = jax.jit(lambda a, b: cross_modal_atten(a, b, params))
    out = jax.block_until_ready(fwd(x1, x2))

    ref = reference(x1, x2, params)
    assert out.shape == (2, 1, D_MODEL), out.shape
    err = float(jnp.max(jnp.abs(out - ref)))
    assert err < 1e-3, err

    print("KERNEL_OK")
</pallas_src>

<mosaic_0001>
module attributes {stable_mosaic.version = 11 : i64} {
  func.func @_cross_modal_kernel(%arg0: i32, %arg1: memref<1x8x64xf32, #tpu.memory_space<vmem>>, %arg2: memref<2x8x64xf32, #tpu.memory_space<vmem>>, %arg3: memref<64x128xf32, #tpu.memory_space<vmem>>, %arg4: memref<1x128xf32, #tpu.memory_space<vmem>>, %arg5: memref<1x128xf32, #tpu.memory_space<vmem>>, %arg6: memref<64x64xf32, #tpu.memory_space<vmem>>, %arg7: memref<3x64xf32, #tpu.memory_space<vmem>>, %arg8: memref<8x64xf32, #tpu.memory_space<vmem>>) attributes {dimension_semantics = [#tpu.dimension_semantics<parallel>], iteration_bounds = array<i64: 1>, scalar_prefetch = 0 : i64, scratch_operands = 0 : i64, tpu.core_type = #tpu.core_type<tc>, window_params = [{transform_indices = @transform_0, window_bounds = array<i64: 1, 8, 64>}, {transform_indices = @transform_1, window_bounds = array<i64: 2, 8, 64>}, {pipeline_mode = #tpu.pipeline_mode<synchronous>, transform_indices = @transform_2, window_bounds = array<i64: 64, 128>}, {pipeline_mode = #tpu.pipeline_mode<synchronous>, transform_indices = @transform_3, window_bounds = array<i64: 1, 128>}, {pipeline_mode = #tpu.pipeline_mode<synchronous>, transform_indices = @transform_4, window_bounds = array<i64: 1, 128>}, {pipeline_mode = #tpu.pipeline_mode<synchronous>, transform_indices = @transform_5, window_bounds = array<i64: 64, 64>}, {pipeline_mode = #tpu.pipeline_mode<synchronous>, transform_indices = @transform_6, window_bounds = array<i64: 3, 64>}, {transform_indices = @transform_7, window_bounds = array<i64: 8, 64>}]} {
    %c0 = arith.constant 0 : index
    %c0_0 = arith.constant 0 : index
    %0 = vector.load %arg3[%c0, %c0_0] : memref<64x128xf32, #tpu.memory_space<vmem>>, vector<64x128xf32>
    %c0_1 = arith.constant 0 : index
    %c0_2 = arith.constant 0 : index
    %1 = vector.load %arg4[%c0_1, %c0_2] : memref<1x128xf32, #tpu.memory_space<vmem>>, vector<1x128xf32>
    %c0_3 = arith.constant 0 : index
    %c0_4 = arith.constant 0 : index
    %c0_5 = arith.constant 0 : index
    %2 = vector.load %arg1[%c0_3, %c0_4, %c0_5] : memref<1x8x64xf32, #tpu.memory_space<vmem>>, vector<1x8x64xf32>
    %3 = vector.shape_cast %2 : vector<1x8x64xf32> to vector<8x64xf32>
    %cst = arith.constant dense<0.000000e+00> : vector<8x128xf32>
    %4 = tpu.matmul %3, %0, %cst {dimension_numbers = #tpu.dot_dimension_numbers<[1], [0], [0], [1], [0, 0, 1, 1], [], []>} : vector<8x64xf32>, vector<64x128xf32>, vector<8x128xf32> -> vector<8x128xf32>
    %5 = vector.broadcast %1 : vector<1x128xf32> to vector<8x128xf32>
    %6 = arith.addf %4, %5 : vector<8x128xf32>
    %c0_6 = arith.constant 0 : index
    %c0_7 = arith.constant 0 : index
    %c0_8 = arith.constant 0 : index
    %7 = vector.load %arg2[%c0_6, %c0_7, %c0_8] : memref<2x8x64xf32, #tpu.memory_space<vmem>>, vector<1x8x64xf32>
    %8 = vector.shape_cast %7 : vector<1x8x64xf32> to vector<8x64xf32>
    %cst_9 = arith.constant dense<0.000000e+00> : vector<8x128xf32>
    %9 = tpu.matmul %8, %0, %cst_9 {dimension_numbers = #tpu.dot_dimension_numbers<[1], [0], [0], [1], [0, 0, 1, 1], [], []>} : vector<8x64xf32>, vector<64x128xf32>, vector<8x128xf32> -> vector<8x128xf32>
    %10 = vector.broadcast %1 : vector<1x128xf32> to vector<8x128xf32>
    %11 = arith.addf %9, %10 : vector<8x128xf32>
    %c1 = arith.constant 1 : index
    %c0_10 = arith.constant 0 : index
    %c0_11 = arith.constant 0 : index
    %12 = vector.load %arg2[%c1, %c0_10, %c0_11] : memref<2x8x64xf32, #tpu.memory_space<vmem>>, vector<1x8x64xf32>
    %13 = vector.shape_cast %12 : vector<1x8x64xf32> to vector<8x64xf32>
    %cst_12 = arith.constant dense<0.000000e+00> : vector<8x128xf32>
    %14 = tpu.matmul %13, %0, %cst_12 {dimension_numbers = #tpu.dot_dimension_numbers<[1], [0], [0], [1], [0, 0, 1, 1], [], []>} : vector<8x64xf32>, vector<64x128xf32>, vector<8x128xf32> -> vector<8x128xf32>
    %15 = vector.broadcast %1 : vector<1x128xf32> to vector<8x128xf32>
    %16 = arith.addf %14, %15 : vector<8x128xf32>
    %17 = vector.extract_strided_slice %6 {offsets = [0, 0], sizes = [8, 64], strides = [1, 1]} : vector<8x128xf32> to vector<8x64xf32>
    %18 = vector.extract_strided_slice %11 {offsets = [0, 0], sizes = [8, 64], strides = [1, 1]} : vector<8x128xf32> to vector<8x64xf32>
    %19 = vector.extract_strided_slice %16 {offsets = [0, 0], sizes = [8, 64], strides = [1, 1]} : vector<8x128xf32> to vector<8x64xf32>
    %20 = vector.extract_strided_slice %6 {offsets = [0, 64], sizes = [8, 64], strides = [1, 1]} : vector<8x128xf32> to vector<8x64xf32>
    %21 = vector.extract_strided_slice %11 {offsets = [0, 64], sizes = [8, 64], strides = [1, 1]} : vector<8x128xf32> to vector<8x64xf32>
    %22 = vector.extract_strided_slice %16 {offsets = [0, 64], sizes = [8, 64], strides = [1, 1]} : vector<8x128xf32> to vector<8x64xf32>
    %c0_13 = arith.constant 0 : index
    %c0_14 = arith.constant 0 : index
    %23 = vector.load %arg5[%c0_13, %c0_14] : memref<1x128xf32, #tpu.memory_space<vmem>>, vector<1x128xf32>
    %24 = vector.extract_strided_slice %23 {offsets = [0, 0], sizes = [1, 64], strides = [1, 1]} : vector<1x128xf32> to vector<1x64xf32>
    %25 = vector.extract_strided_slice %23 {offsets = [0, 64], sizes = [1, 64], strides = [1, 1]} : vector<1x128xf32> to vector<1x64xf32>
    %26 = vector.broadcast %24 : vector<1x64xf32> to vector<8x64xf32>
    %27 = arith.maximumf %26, %17 : vector<8x64xf32>
    %28 = arith.maximumf %27, %18 : vector<8x64xf32>
    %29 = arith.maximumf %28, %19 : vector<8x64xf32>
    %30 = vector.broadcast %24 : vector<1x64xf32> to vector<8x64xf32>
    %31 = arith.subf %30, %29 : vector<8x64xf32>
    %32 = math.exp %31 : vector<8x64xf32>
    %33 = vector.broadcast %25 : vector<1x64xf32> to vector<8x64xf32>
    %34 = arith.mulf %32, %33 : vector<8x64xf32>
    %35 = arith.subf %17, %29 : vector<8x64xf32>
    %36 = math.exp %35 : vector<8x64xf32>
    %37 = arith.addf %32, %36 : vector<8x64xf32>
    %38 = arith.mulf %36, %20 : vector<8x64xf32>
    %39 = arith.addf %34, %38 : vector<8x64xf32>
    %40 = arith.subf %18, %29 : vector<8x64xf32>
    %41 = math.exp %40 : vector<8x64xf32>
    %42 = arith.addf %37, %41 : vector<8x64xf32>
    %43 = arith.mulf %41, %21 : vector<8x64xf32>
    %44 = arith.addf %39, %43 : vector<8x64xf32>
    %45 = arith.subf %19, %29 : vector<8x64xf32>
    %46 = math.exp %45 : vector<8x64xf32>
    %47 = arith.addf %42, %46 : vector<8x64xf32>
    %48 = arith.mulf %46, %22 : vector<8x64xf32>
    %49 = arith.addf %44, %48 : vector<8x64xf32>
    %50 = tpu.reciprocal %47 : vector<8x64xf32> -> vector<8x64xf32>
    %51 = arith.mulf %49, %50 : vector<8x64xf32>
    %c0_15 = arith.constant 0 : index
    %c0_16 = arith.constant 0 : index
    %52 = vector.load %arg6[%c0_15, %c0_16] : memref<64x64xf32, #tpu.memory_space<vmem>>, vector<64x64xf32>
    %cst_17 = arith.constant dense<0.000000e+00> : vector<8x64xf32>
    %53 = tpu.matmul %51, %52, %cst_17 {dimension_numbers = #tpu.dot_dimension_numbers<[1], [0], [0], [1], [0, 0, 1, 1], [], []>} : vector<8x64xf32>, vector<64x64xf32>, vector<8x64xf32> -> vector<8x64xf32>
    %c0_18 = arith.constant 0 : index
    %c0_19 = arith.constant 0 : index
    %54 = vector.load %arg7[%c0_18, %c0_19] : memref<3x64xf32, #tpu.memory_space<vmem>>, vector<1x64xf32>
    %55 = vector.broadcast %54 : vector<1x64xf32> to vector<8x64xf32>
    %56 = arith.addf %53, %55 : vector<8x64xf32>
    %cst_20 = arith.constant dense<0.000000e+00> : vector<8xf32>
    %57 = vector.multi_reduction <add>, %56, %cst_20 [1] : vector<8x64xf32> to vector<8xf32>
    %58 = vector.shape_cast %57 : vector<8xf32> to vector<8x1xf32>
    %cst_21 = arith.constant 6.400000e+01 : f32
    %59 = vector.broadcast %cst_21 : f32 to vector<8x1xf32>
    %60 = arith.divf %58, %59 : vector<8x1xf32>
    %61 = vector.broadcast %60 : vector<8x1xf32> to vector<8x64xf32>
    %62 = arith.subf %56, %61 : vector<8x64xf32>
    %63 = arith.mulf %62, %62 : vector<8x64xf32>
    %cst_22 = arith.constant dense<0.000000e+00> : vector<8xf32>
    %64 = vector.multi_reduction <add>, %63, %cst_22 [1] : vector<8x64xf32> to vector<8xf32>
    %65 = vector.shape_cast %64 : vector<8xf32> to vector<8x1xf32>
    %cst_23 = arith.constant 6.400000e+01 : f32
    %66 = vector.broadcast %cst_23 : f32 to vector<8x1xf32>
    %67 = arith.divf %65, %66 : vector<8x1xf32>
    %68 = vector.broadcast %60 : vector<8x1xf32> to vector<8x64xf32>
    %69 = arith.subf %56, %68 : vector<8x64xf32>
    %cst_24 = arith.constant 9.99999974E-6 : f32
    %70 = vector.broadcast %cst_24 : f32 to vector<8x1xf32>
    %71 = arith.addf %67, %70 : vector<8x1xf32>
    %72 = math.rsqrt %71 : vector<8x1xf32>
    %73 = vector.broadcast %72 : vector<8x1xf32> to vector<8x64xf32>
    %74 = arith.mulf %69, %73 : vector<8x64xf32>
    %c1_25 = arith.constant 1 : index
    %c0_26 = arith.constant 0 : index
    %75 = vector.load %arg7[%c1_25, %c0_26] : memref<3x64xf32, #tpu.memory_space<vmem>>, vector<1x64xf32>
    %76 = vector.broadcast %75 : vector<1x64xf32> to vector<8x64xf32>
    %77 = arith.mulf %74, %76 : vector<8x64xf32>
    %c2 = arith.constant 2 : index
    %c0_27 = arith.constant 0 : index
    %78 = vector.load %arg7[%c2, %c0_27] : memref<3x64xf32, #tpu.memory_space<vmem>>, vector<1x64xf32>
    %79 = vector.broadcast %78 : vector<1x64xf32> to vector<8x64xf32>
    %80 = arith.addf %77, %79 : vector<8x64xf32>
    %c0_28 = arith.constant 0 : index
    %c0_29 = arith.constant 0 : index
    %81 = vector.load %arg8[%c0_28, %c0_29] : memref<8x64xf32, #tpu.memory_space<vmem>>, vector<8x64xf32>
    tpu.vector_store %arg8[%c0_28, %c0_29], %80 {strides = array<i32>} : memref<8x64xf32, #tpu.memory_space<vmem>>, vector<8x64xf32>,
    return
  }
  func.func @transform_0(%arg0: i32) -> (i32, i32, i32) {
    %c0_i32 = arith.constant 0 : i32
    %c0_i32_0 = arith.constant 0 : i32
    %c0_i32_1 = arith.constant 0 : i32
    return %c0_i32, %arg0, %c0_i32_0 : i32, i32, i32
  }
  func.func @transform_1(%arg0: i32) -> (i32, i32, i32) {
    %c0_i32 = arith.constant 0 : i32
    %c0_i32_0 = arith.constant 0 : i32
    %c0_i32_1 = arith.constant 0 : i32
    return %c0_i32, %arg0, %c0_i32_0 : i32, i32, i32
  }
  func.func @transform_2(%arg0: i32) -> (i32, i32) {
    %c0_i32 = arith.constant 0 : i32
    %c0_i32_0 = arith.constant 0 : i32
    %c0_i32_1 = arith.constant 0 : i32
    return %c0_i32, %c0_i32_0 : i32, i32
  }
  func.func @transform_3(%arg0: i32) -> (i32, i32) {
    %c0_i32 = arith.constant 0 : i32
    %c0_i32_0 = arith.constant 0 : i32
    %c0_i32_1 = arith.constant 0 : i32
    return %c0_i32, %c0_i32_0 : i32, i32
  }
  func.func @transform_4(%arg0: i32) -> (i32, i32) {
    %c0_i32 = arith.constant 0 : i32
    %c0_i32_0 = arith.constant 0 : i32
    %c0_i32_1 = arith.constant 0 : i32
    return %c0_i32, %c0_i32_0 : i32, i32
  }
  func.func @transform_5(%arg0: i32) -> (i32, i32) {
    %c0_i32 = arith.constant 0 : i32
    %c0_i32_0 = arith.constant 0 : i32
    %c0_i32_1 = arith.constant 0 : i32
    return %c0_i32, %c0_i32_0 : i32, i32
  }
  func.func @transform_6(%arg0: i32) -> (i32, i32) {
    %c0_i32 = arith.constant 0 : i32
    %c0_i32_0 = arith.constant 0 : i32
    %c0_i32_1 = arith.constant 0 : i32
    return %c0_i32, %c0_i32_0 : i32, i32
  }
  func.func @transform_7(%arg0: i32) -> (i32, i32) {
    %c0_i32 = arith.constant 0 : i32
    %c0_i32_0 = arith.constant 0 : i32
    return %arg0, %c0_i32 : i32, i32
  }
}

</mosaic_0001>

<llo_original>
// kernel: _lambda_.1
$region0: #{_lambda_.1}
  #allocation0 [shape = 'u32[]', space=smem, size = 0x4, offset = 0x4, fixed_abs, tag = 'smem constant byte address 0x4 - core index']
  #allocation1 [shape = 'u32[144,128]{1,0:T(1,128)}', space=vmem, size = 0x12000, scoped, tag = 'internal scratch']
  %s0 = inlined_call_operand.vmem [shape: f32[1,8,64], index: 0, kind: input, shape index: {}]
  %s1 = inlined_call_operand.vmem [shape: f32[2,8,64], index: 1, kind: input, shape index: {}]
  %s2 = inlined_call_operand.vmem [shape: f32[64,128], index: 2, kind: input, shape index: {}]
  %s3 = inlined_call_operand.vmem [shape: f32[1,128], index: 3, kind: input, shape index: {}]
  %s4 = inlined_call_operand.vmem [shape: f32[1,128], index: 4, kind: input, shape index: {}]
  %s5 = inlined_call_operand.vmem [shape: f32[64,64], index: 5, kind: input, shape index: {}]
  %s6 = inlined_call_operand.vmem [shape: f32[3,64], index: 6, kind: input, shape index: {}]
  %s7 = inlined_call_operand.vmem [shape: f32[8,64], index: 7, kind: output, shape index: {}]
  %s8 = sld [smem:[#allocation0]]
  $region38: #{_lambda_.1} parent=0
    _
  %s10 = ssub.s32 1, %s8
  %s11 = scalar_select 0, %s10, %s8
  // Predicated region
  $region2: #{_lambda_.1} parent=0 // pred_check
    _
  $region3: #{_lambda_.1} parent=0 // pred_check_branch
    %13 = sbr.rel (0) target = $region5
  $region4: #{_lambda_.1} parent=0 // pred_region
    _
  $region5: #{_lambda_.1} parent=0 // pred_fallthru
    _
  // Predicated region
  $region6: #{_lambda_.1} parent=0 // pred_check
    _
  $region7: #{_lambda_.1} parent=0 // pred_check_branch
    %15 = sbr.rel (0) target = $region9
  $region8: #{_lambda_.1} parent=0 // pred_region
    _
  $region9: #{_lambda_.1} parent=0 // pred_fallthru
    _
  // Predicated region
  $region10: #{_lambda_.1} parent=0 // pred_check
    _
  $region11: #{_lambda_.1} parent=0 // pred_check_branch
    %17 = sbr.rel (0) target = $region13
  $region12: #{_lambda_.1} parent=0 // pred_region
    _
  $region13: #{_lambda_.1} parent=0 // pred_fallthru
    _
  // Predicated region
  $region14: #{_lambda_.1} parent=0 // pred_check
    _
  $region15: #{_lambda_.1} parent=0 // pred_check_branch
    %19 = sbr.rel (0) target = $region17
  $region16: #{_lambda_.1} parent=0 // pred_region
    _
  $region17: #{_lambda_.1} parent=0 // pred_fallthru
    _
  // Predicated region
  $region18: #{_lambda_.1} parent=0 // pred_check
    _
  $region19: #{_lambda_.1} parent=0 // pred_check_branch
    %21 = sbr.rel (0) target = $region21
  $region20: #{_lambda_.1} parent=0 // pred_region
    _
  $region21: #{_lambda_.1} parent=0 // pred_fallthru
    _
  // Predicated region
  $region22: #{_lambda_.1} parent=0 // pred_check
    _
  $region23: #{_lambda_.1} parent=0 // pred_check_branch
    %23 = sbr.rel (0) target = $region25
  $region24: #{_lambda_.1} parent=0 // pred_region
    _
  $region25: #{_lambda_.1} parent=0 // pred_fallthru
    _
  // Predicated region
  $region26: #{_lambda_.1} parent=0 // pred_check
    _
  $region27: #{_lambda_.1} parent=0 // pred_check_branch
    %25 = sbr.rel (0) target = $region29
  $region28: #{_lambda_.1} parent=0 // pred_region
    _
  $region29: #{_lambda_.1} parent=0 // pred_fallthru
    _
  %v26 = vld [vmem:[%s2] sm:$0xff]
  %v27 = vld [vmem:[%s2 + $0x8] sm:$0xff]
  %v28 = vld [vmem:[%s2 + $0x10] sm:$0xff]
  %v29 = vld [vmem:[%s2 + $0x18] sm:$0xff]
  %v30 = vld [vmem:[%s2 + $0x20] sm:$0xff]
  %v31 = vld [vmem:[%s2 + $0x28] sm:$0xff]
  %v32 = vld [vmem:[%s2 + $0x30] sm:$0xff]
  %v33 = vld [vmem:[%s2 + $0x38] sm:$0xff]
  %v34 = vld [vmem:[%s3] sm:$0x1]
  %v35 = vld [vmem:[%s0] sm:$0xff]
  %v37 = vlaneseq
  %v38 = vshrl.u32 %v37, 7
  %v39 = vsub.s32 0, %v38
  %v40 = vrot.slane %v34, %v39
  %vm42 = vcmask 523264
  %v44 = vsel %vm42, %v35, 0
  %46 = vmatprep.subr.mxu0 0.0
  %47 = vmatpush1.msra.mxu0 %v26
  %48 = vmatprep.subr.mxu0 0.0
  %49 = vmatpush1.msra.mxu0 %v27
  %50 = vmatprep.subr.mxu0 0.0
  %51 = vmatpush1.msra.mxu0 %v28
  %52 = vmatprep.subr.mxu0 0.0
  %53 = vmatpush1.msra.mxu0 %v29
  %54 = vmatprep.subr.mxu0 0.0
  %55 = vmatpush1.msra.mxu0 %v30
  %56 = vmatprep.subr.mxu0 0.0
  %57 = vmatpush1.msra.mxu0 %v31
  %58 = vmatprep.subr.mxu0 0.0
  %59 = vmatpush1.msra.mxu0 %v32
  %60 = vmatprep.subr.mxu0 0.0
  %61 = vmatpush1.msra.mxu0 %v33
  %62 = vmatprep.subr.mxu0 0.0
  %63 = vmatpush1.msra.mxu0 0.0
  %64 = vmatprep.subr.mxu0 0.0
  %65 = vmatpush1.msra.mxu0 0.0
  %66 = vmatprep.subr.mxu0 0.0
  %67 = vmatpush1.msra.mxu0 0.0
  %68 = vmatprep.subr.mxu0 0.0
  %69 = vmatpush1.msra.mxu0 0.0
  %70 = vmatprep.subr.mxu0 0.0
  %71 = vmatpush1.msra.mxu0 0.0
  %72 = vmatprep.subr.mxu0 0.0
  %73 = vmatpush1.msra.mxu0 0.0
  %74 = vmatprep.subr.mxu0 0.0
  %75 = vmatpush1.msra.mxu0 0.0
  %76 = vmatprep.subr.mxu0 0.0
  %77 = vmatpush1.msra.mxu0 0.0
  %78 = vmatprep.subr.mxu0 0.0
  %79 = vmatpush1.msra.mxu0 0.0
  %80 = vmatprep.subr.mxu0 0.0
  %81 = vmatpush1.msra.mxu0 0.0
  %82 = vmatprep.subr.mxu0 0.0
  %83 = vmatpush1.msra.mxu0 0.0
  %84 = vmatprep.subr.mxu0 0.0
  %85 = vmatpush1.msra.mxu0 0.0
  %86 = vmatprep.subr.mxu0 0.0
  %87 = vmatpush1.msra.mxu0 0.0
  %88 = vmatprep.subr.mxu0 0.0
  %89 = vmatpush1.msra.mxu0 0.0
  %90 = vmatprep.subr.mxu0 0.0
  %91 = vmatpush1.msra.mxu0 0.0
  %92 = vmatprep.subr.mxu0 0.0
  %93 = vmatpush1.msra.mxu0 0.0
  %94 = vmatprep.subr.mxu0 0.0
  %95 = vmatpush1.msra.mxu0 0.0
  %96 = vmatprep.subr.mxu0 0.0
  %97 = vmatpush1.msra.mxu0 0.0
  %98 = vmatprep.subr.mxu0 0.0
  %99 = vmatpush1.msra.mxu0 0.0
  %100 = vmatprep.subr.mxu0 0.0
  %101 = vmatpush1.msra.mxu0 0.0
  %102 = vmatprep.subr.mxu0 0.0
  %103 = vmatpush1.msra.mxu0 0.0
  %104 = vmatprep.subr.mxu0 0.0
  %105 = vmatpush1.msra.mxu0 0.0
  %106 = vmatprep.subr.mxu0 0.0
  %107 = vmatpush1.msra.mxu0 0.0
  %108 = vmatprep.subr.mxu0 0.0
  %109 = vmatpush1.msra.mxu0 0.0
  %110 = vmatprep.mubr.f32.mxu0 0.0
  %111 = vmatmul.mubr.f32.gmra.mrb[0].mxu0 %v44
  %v112 = vpop.f32.mrb[0].mxu0
  %v113 = vadd.f32 %v40, %v112
  %v114 = vpop.f32.mrb[0].mxu0
  %115 = vdwg.mxu0
  %v116 = vld [vmem:[%s1] sm:$0xff]
  %v118 = vsel %vm42, %v116, 0
  %120 = vmatprep.subr.mxu0 0.0
  %121 = vmatpush1.msra.mxu0 %v26
  %122 = vmatprep.subr.mxu0 0.0
  %123 = vmatpush1.msra.mxu0 %v27
  %124 = vmatprep.subr.mxu0 0.0
  %125 = vmatpush1.msra.mxu0 %v28
  %126 = vmatprep.subr.mxu0 0.0
  %127 = vmatpush1.msra.mxu0 %v29
  %128 = vmatprep.subr.mxu0 0.0
  %129 = vmatpush1.msra.mxu0 %v30
  %130 = vmatprep.subr.mxu0 0.0
  %131 = vmatpush1.msra.mxu0 %v31
  %132 = vmatprep.subr.mxu0 0.0
  %133 = vmatpush1.msra.mxu0 %v32
  %134 = vmatprep.subr.mxu0 0.0
  %135 = vmatpush1.msra.mxu0 %v33
  %136 = vmatprep.subr.mxu0 0.0
  %137 = vmatpush1.msra.mxu0 0.0
  %138 = vmatprep.subr.mxu0 0.0
  %139 = vmatpush1.msra.mxu0 0.0
  %140 = vmatprep.subr.mxu0 0.0
  %141 = vmatpush1.msra.mxu0 0.0
  %142 = vmatprep.subr.mxu0 0.0
  %143 = vmatpush1.msra.mxu0 0.0
  %144 = vmatprep.subr.mxu0 0.0
  %145 = vmatpush1.msra.mxu0 0.0
  %146 = vmatprep.subr.mxu0 0.0
  %147 = vmatpush1.msra.mxu0 0.0
  %148 = vmatprep.subr.mxu0 0.0
  %149 = vmatpush1.msra.mxu0 0.0
  %150 = vmatprep.subr.mxu0 0.0
  %151 = vmatpush1.msra.mxu0 0.0
  %152 = vmatprep.subr.mxu0 0.0
  %153 = vmatpush1.msra.mxu0 0.0
  %154 = vmatprep.subr.mxu0 0.0
  %155 = vmatpush1.msra.mxu0 0.0
  %156 = vmatprep.subr.mxu0 0.0
  %157 = vmatpush1.msra.mxu0 0.0
  %158 = vmatprep.subr.mxu0 0.0
  %159 = vmatpush1.msra.mxu0 0.0
  %160 = vmatprep.subr.mxu0 0.0
  %161 = vmatpush1.msra.mxu0 0.0
  %162 = vmatprep.subr.mxu0 0.0
  %163 = vmatpush1.msra.mxu0 0.0
  %164 = vmatprep.subr.mxu0 0.0
  %165 = vmatpush1.msra.mxu0 0.0
  %166 = vmatprep.subr.mxu0 0.0
  %167 = vmatpush1.msra.mxu0 0.0
  %168 = vmatprep.subr.mxu0 0.0
  %169 = vmatpush1.msra.mxu0 0.0
  %170 = vmatprep.subr.mxu0 0.0
  %171 = vmatpush1.msra.mxu0 0.0
  %172 = vmatprep.subr.mxu0 0.0
  %173 = vmatpush1.msra.mxu0 0.0
  %174 = vmatprep.subr.mxu0 0.0
  %175 = vmatpush1.msra.mxu0 0.0
  %176 = vmatprep.subr.mxu0 0.0
  %177 = vmatpush1.msra.mxu0 0.0
  %178 = vmatprep.subr.mxu0 0.0
  %179 = vmatpush1.msra.mxu0 0.0
  %180 = vmatprep.subr.mxu0 0.0
  %181 = vmatpush1.msra.mxu0 0.0
  %182 = vmatprep.subr.mxu0 0.0
  %183 = vmatpush1.msra.mxu0 0.0
  %184 = vmatprep.mubr.f32.mxu0 0.0
  %185 = vmatmul.mubr.f32.gmra.mrb[0].mxu0 %v118
  %v186 = vpop.f32.mrb[0].mxu0
  %v187 = vadd.f32 %v40, %v186
  %v188 = vpop.f32.mrb[0].mxu0
  %189 = vdwg.mxu0
  %s190 = scalar_lea.vmem %s1, 8
  %v191 = vld [vmem:[%s190] sm:$0xff]
  %v193 = vsel %vm42, %v191, 0
  %195 = vmatprep.subr.mxu0 0.0
  %196 = vmatpush1.msra.mxu0 %v26
  %197 = vmatprep.subr.mxu0 0.0
  %198 = vmatpush1.msra.mxu0 %v27
  %199 = vmatprep.subr.mxu0 0.0
  %200 = vmatpush1.msra.mxu0 %v28
  %201 = vmatprep.subr.mxu0 0.0
  %202 = vmatpush1.msra.mxu0 %v29
  %203 = vmatprep.subr.mxu0 0.0
  %204 = vmatpush1.msra.mxu0 %v30
  %205 = vmatprep.subr.mxu0 0.0
  %206 = vmatpush1.msra.mxu0 %v31
  %207 = vmatprep.subr.mxu0 0.0
  %208 = vmatpush1.msra.mxu0 %v32
  %209 = vmatprep.subr.mxu0 0.0
  %210 = vmatpush1.msra.mxu0 %v33
  %211 = vmatprep.subr.mxu0 0.0
  %212 = vmatpush1.msra.mxu0 0.0
  %213 = vmatprep.subr.mxu0 0.0
  %214 = vmatpush1.msra.mxu0 0.0
  %215 = vmatprep.subr.mxu0 0.0
  %216 = vmatpush1.msra.mxu0 0.0
  %217 = vmatprep.subr.mxu0 0.0
  %218 = vmatpush1.msra.mxu0 0.0
  %219 = vmatprep.subr.mxu0 0.0
  %220 = vmatpush1.msra.mxu0 0.0
  %221 = vmatprep.subr.mxu0 0.0
  %222 = vmatpush1.msra.mxu0 0.0
  %223 = vmatprep.subr.mxu0 0.0
  %224 = vmatpush1.msra.mxu0 0.0
  %225 = vmatprep.subr.mxu0 0.0
  %226 = vmatpush1.msra.mxu0 0.0
  %227 = vmatprep.subr.mxu0 0.0
  %228 = vmatpush1.msra.mxu0 0.0
  %229 = vmatprep.subr.mxu0 0.0
  %230 = vmatpush1.msra.mxu0 0.0
  %231 = vmatprep.subr.mxu0 0.0
  %232 = vmatpush1.msra.mxu0 0.0
  %233 = vmatprep.subr.mxu0 0.0
  %234 = vmatpush1.msra.mxu0 0.0
  %235 = vmatprep.subr.mxu0 0.0
  %236 = vmatpush1.msra.mxu0 0.0
  %237 = vmatprep.subr.mxu0 0.0
  %238 = vmatpush1.msra.mxu0 0.0
  %239 = vmatprep.subr.mxu0 0.0
  %240 = vmatpush1.msra.mxu0 0.0
  %241 = vmatprep.subr.mxu0 0.0
  %242 = vmatpush1.msra.mxu0 0.0
  %243 = vmatprep.subr.mxu0 0.0
  %244 = vmatpush1.msra.mxu0 0.0
  %245 = vmatprep.subr.mxu0 0.0
  %246 = vmatpush1.msra.mxu0 0.0
  %247 = vmatprep.subr.mxu0 0.0
  %248 = vmatpush1.msra.mxu0 0.0
  %249 = vmatprep.subr.mxu0 0.0
  %250 = vmatpush1.msra.mxu0 0.0
  %251 = vmatprep.subr.mxu0 0.0
  %252 = vmatpush1.msra.mxu0 0.0
  %253 = vmatprep.subr.mxu0 0.0
  %254 = vmatpush1.msra.mxu0 0.0
  %255 = vmatprep.subr.mxu0 0.0
  %256 = vmatpush1.msra.mxu0 0.0
  %257 = vmatprep.subr.mxu0 0.0
  %258 = vmatpush1.msra.mxu0 0.0
  %259 = vmatprep.mubr.f32.mxu0 0.0
  %260 = vmatmul.mubr.f32.gmra.mrb[0].mxu0 %v193
  %v261 = vpop.f32.mrb[0].mxu0
  %v262 = vadd.f32 %v40, %v261
  %v263 = vpop.f32.mrb[0].mxu0
  %264 = vdwg.mxu0
  %v265 = vld [vmem:[%s4] sm:$0x1]
  %v267 = vlaneseq
  %v268 = vshrl.u32 %v267, 7
  %v269 = vsub.s32 0, %v268
  %v270 = vrot.slane %v265, %v269
  %v272 = vmax.f32 %v270, %v113
  %v273 = vmax.f32 %v272, %v187
  %v274 = vmax.f32 %v273, %v262
  %v275 = vsub.f32 %v270, %v274
  %v276 = vmul.f32 %v275, 1.442695
  %v277 = vpow.pop %v276
  %278 = vrot.lane.b32.xlu0 %v270, 64
  %v279 = vpop.permute.xlu0 %278
  %v281 = vmul.f32 %v277, %v279
  %v282 = vsub.f32 %v113, %v274
  %v283 = vmul.f32 %v282, 1.442695
  %v284 = vpow.pop %v283
  %v285 = vadd.f32 %v277, %v284
  %287 = vrot.lane.b32.xlu0 %v113, 64
  %v288 = vpop.permute.xlu0 %287
  %v290 = vmul.f32 %v284, %v288
  %v291 = vadd.f32 %v281, %v290
  %v292 = vsub.f32 %v187, %v274
  %v293 = vmul.f32 %v292, 1.442695
  %v294 = vpow.pop %v293
  %v295 = vadd.f32 %v285, %v294
  %297 = vrot.lane.b32.xlu0 %v187, 64
  %v298 = vpop.permute.xlu0 %297
  %v300 = vmul.f32 %v294, %v298
  %v301 = vadd.f32 %v291, %v300
  %v302 = vsub.f32 %v262, %v274
  %v303 = vmul.f32 %v302, 1.442695
  %v304 = vpow.pop %v303
  %v305 = vadd.f32 %v295, %v304
  %307 = vrot.lane.b32.xlu0 %v262, 64
  %v308 = vpop.permute.xlu0 %307
  %v310 = vmul.f32 %v304, %v308
  %v311 = vadd.f32 %v301, %v310
  %v312 = vrcp.pop %v305
  %v313 = vmul.f32 %v311, %v312
  %v314 = vld [vmem:[%s5] sm:$0xff]
  %v315 = vld [vmem:[%s5 + $0x8] sm:$0xff]
  %v316 = vld [vmem:[%s5 + $0x10] sm:$0xff]
  %v317 = vld [vmem:[%s5 + $0x18] sm:$0xff]
  %v318 = vld [vmem:[%s5 + $0x20] sm:$0xff]
  %v319 = vld [vmem:[%s5 + $0x28] sm:$0xff]
  %v320 = vld [vmem:[%s5 + $0x30] sm:$0xff]
  %v321 = vld [vmem:[%s5 + $0x38] sm:$0xff]
  %v322 = vld [vmem:[%s6] sm:$0x1]
  %v323 = vlaneseq
  %v324 = vshrl.u32 %v323, 7
  %v325 = vsub.s32 0, %v324
  %v326 = vrot.slane %v322, %v325
  %v328 = vsel %vm42, %v313, 0
  %330 = vmatprep.subr.mxu0 0.0
  %331 = vmatpush1.msra.mxu0 %v314
  %332 = vmatprep.subr.mxu0 0.0
  %333 = vmatpush1.msra.mxu0 %v315
  %334 = vmatprep.subr.mxu0 0.0
  %335 = vmatpush1.msra.mxu0 %v316
  %336 = vmatprep.subr.mxu0 0.0
  %337 = vmatpush1.msra.mxu0 %v317
  %338 = vmatprep.subr.mxu0 0.0
  %339 = vmatpush1.msra.mxu0 %v318
  %340 = vmatprep.subr.mxu0 0.0
  %341 = vmatpush1.msra.mxu0 %v319
  %342 = vmatprep.subr.mxu0 0.0
  %343 = vmatpush1.msra.mxu0 %v320
  %344 = vmatprep.subr.mxu0 0.0
  %345 = vmatpush1.msra.mxu0 %v321
  %346 = vmatprep.subr.mxu0 0.0
  %347 = vmatpush1.msra.mxu0 0.0
  %348 = vmatprep.subr.mxu0 0.0
  %349 = vmatpush1.msra.mxu0 0.0
  %350 = vmatprep.subr.mxu0 0.0
  %351 = vmatpush1.msra.mxu0 0.0
  %352 = vmatprep.subr.mxu0 0.0
  %353 = vmatpush1.msra.mxu0 0.0
  %354 = vmatprep.subr.mxu0 0.0
  %355 = vmatpush1.msra.mxu0 0.0
  %356 = vmatprep.subr.mxu0 0.0
  %357 = vmatpush1.msra.mxu0 0.0
  %358 = vmatprep.subr.mxu0 0.0
  %359 = vmatpush1.msra.mxu0 0.0
  %360 = vmatprep.subr.mxu0 0.0
  %361 = vmatpush1.msra.mxu0 0.0
  %362 = vmatprep.subr.mxu0 0.0
  %363 = vmatpush1.msra.mxu0 0.0
  %364 = vmatprep.subr.mxu0 0.0
  %365 = vmatpush1.msra.mxu0 0.0
  %366 = vmatprep.subr.mxu0 0.0
  %367 = vmatpush1.msra.mxu0 0.0
  %368 = vmatprep.subr.mxu0 0.0
  %369 = vmatpush1.msra.mxu0 0.0
  %370 = vmatprep.subr.mxu0 0.0
  %371 = vmatpush1.msra.mxu0 0.0
  %372 = vmatprep.subr.mxu0 0.0
  %373 = vmatpush1.msra.mxu0 0.0
  %374 = vmatprep.subr.mxu0 0.0
  %375 = vmatpush1.msra.mxu0 0.0
  %376 = vmatprep.subr.mxu0 0.0
  %377 = vmatpush1.msra.mxu0 0.0
  %378 = vmatprep.subr.mxu0 0.0
  %379 = vmatpush1.msra.mxu0 0.0
  %380 = vmatprep.subr.mxu0 0.0
  %381 = vmatpush1.msra.mxu0 0.0
  %382 = vmatprep.subr.mxu0 0.0
  %383 = vmatpush1.msra.mxu0 0.0
  %384 = vmatprep.subr.mxu0 0.0
  %385 = vmatpush1.msra.mxu0 0.0
  %386 = vmatprep.subr.mxu0 0.0
  %387 = vmatpush1.msra.mxu0 0.0
  %388 = vmatprep.subr.mxu0 0.0
  %389 = vmatpush1.msra.mxu0 0.0
  %390 = vmatprep.subr.mxu0 0.0
  %391 = vmatpush1.msra.mxu0 0.0
  %392 = vmatprep.subr.mxu0 0.0
  %393 = vmatpush1.msra.mxu0 0.0
  %394 = vmatprep.mubr.f32.mxu0 0.0
  %395 = vmatmul.mubr.f32.gmra.mrb[0].mxu0 %v328
  %v396 = vpop.f32.mrb[0].mxu0
  %v397 = vadd.f32 %v326, %v396
  %v398 = vpop.f32.mrb[0].mxu0
  %399 = vdwg.mxu0
  %v400 = vsel %vm42, %v397, 0.0
  %401 = vadd.xlane.f32.xlu0 %v400
  %v402 = vpop.xlane.xlu0 %401
  %v403 = vrcp.pop 64.0
  %v404 = vmul.f32 %v402, %v403
  %v405 = vsub.f32 %v397, %v404
  %v406 = vmul.f32 %v405, %v405
  %v407 = vsel %vm42, %v406, 0.0
  %408 = vadd.xlane.f32.xlu0 %v407
  %v409 = vpop.xlane.xlu0 %408
  %v410 = vmul.f32 %v409, %v403
  %v411 = vadd.f32 %v410, 1e-05
  %v412 = vrsqrt.pop %v411
  %v413 = vmul.f32 %v405, %v412
  %v414 = vld [vmem:[%s6 + $0x1] sm:$0x1]
  %v415 = vlaneseq
  %v416 = vshrl.u32 %v415, 7
  %v417 = vsub.s32 0, %v416
  %v418 = vrot.slane %v414, %v417
  %v419 = vmul.f32 %v413, %v418
  %v420 = vld [vmem:[%s6 + $0x2] sm:$0x1]
  %v421 = vlaneseq
  %v422 = vshrl.u32 %v421, 7
  %v423 = vsub.s32 0, %v422
  %v424 = vrot.slane %v420, %v423
  %v425 = vadd.f32 %v419, %v424
  %426 = vst.msk [vmem:[%s7] sm:$0xff] %vm42, %v425
  // Predicated region
  $region30: #{_lambda_.1} parent=0 // pred_check
    _
  $region31: #{_lambda_.1} parent=0 // pred_check_branch
    %428 = sbr.rel (0) target = $region33
  $region32: #{_lambda_.1} parent=0 // pred_region
    _
  $region33: #{_lambda_.1} parent=0 // pred_fallthru
    _
  // Predicated region
  $region34: #{_lambda_.1} parent=0 // pred_check
    _
  $region35: #{_lambda_.1} parent=0 // pred_check_branch
    %430 = sbr.rel (0) target = $region37
  $region36: #{_lambda_.1} parent=0 // pred_region
    _
  $region37: #{_lambda_.1} parent=0 // pred_fallthru
    _

</llo_original>
